<compile_context>
chip_gen: v7x
topology: tpu7x:2x2x1
jax: 0.10.0
libtpu: 0.0.40
codegen_flags: <defaults>
</compile_context>

<pallas_src>
import math
import functools

import jax
import jax.numpy as jnp
from jax.experimental import pallas as pl
from jax.experimental.pallas import tpu as pltpu

LANES = 128
ROW_ALIGN = 8                # sublanes per f32 vreg
SUB_ROWS = 64                # inner-loop chunk rows: (64,128) f32 = 8 vregs/temp
MAX_BLOCK_ROWS = 8192        # (8192,128) f32 = 4 MiB per input per pipeline buffer


def _round_up(x, m):
    return ((x + m - 1) // m) * m


def _block_partial_sum(pred_ref, target_ref, weight_ref, n_rows, *,
                       alpha, gamma, beta, sub_rows):
    """Balanced-L1 partial sums over the first `n_rows` rows of the refs.

    Returns an (8, 128) f32 tile of per-lane partial sums.  `n_rows` is a
    static Python int and a multiple of ROW_ALIGN, so no element masking is
    ever needed.
    """
    b = math.e ** (gamma / alpha) - 1.0
    alpha_over_b = alpha / b
    b_over_beta = b / beta
    large_const = gamma / b - alpha * beta

    def loss_chunk(r0, nrows):
        p = pred_ref[pl.ds(r0, nrows), :]
        t = target_ref[pl.ds(r0, nrows), :]
        if p.dtype != jnp.float32:
            p = p.astype(jnp.float32)
        if t.dtype != jnp.float32:
            t = t.astype(jnp.float32)
        diff = jnp.abs(p - t)
        ad = alpha * diff
        # (alpha/b) * (b*diff + 1) == alpha*diff + alpha/b  (fold constants)
        small = (ad + alpha_over_b) * jnp.log(diff * b_over_beta + 1.0) - ad
        large = gamma * diff + large_const
        loss = jnp.where(diff < beta, small, large)
        if weight_ref is not None:
            w = weight_ref[pl.ds(r0, nrows), :]
            if w.dtype != jnp.float32:
                w = w.astype(jnp.float32)
            loss = loss * w
        return loss

    def fold8(x):
        r = x.shape[0]
        if r == ROW_ALIGN:
            return x
        return x.reshape(r // ROW_ALIGN, ROW_ALIGN, LANES).sum(axis=0)

    n_full = n_rows // sub_rows
    rem = n_rows % sub_rows

    if n_full == 1 and rem == 0:
        return fold8(loss_chunk(0, sub_rows))

    acc8 = jnp.zeros((ROW_ALIGN, LANES), jnp.float32)
    if n_full > 0:
        def body(s, acc):
            r0 = pl.multiple_of(s * sub_rows, sub_rows)
            return acc + loss_chunk(r0, sub_rows)
        acc = jax.lax.fori_loop(0, n_full, body,
                                jnp.zeros((sub_rows, LANES), jnp.float32),
                                unroll=min(4, n_full))
        acc8 = fold8(acc)
    if rem > 0:
        acc8 = acc8 + fold8(loss_chunk(n_full * sub_rows, rem))
    return acc8


def _kernel_impl(pred_ref, target_ref, weight_ref, out_ref, *,
                 alpha, gamma, beta, block_rows, last_rows, sub_rows):
    kw = dict(alpha=alpha, gamma=gamma, beta=beta, sub_rows=sub_rows)
    if last_rows == block_rows:
        out_ref[...] = _block_partial_sum(pred_ref, target_ref, weight_ref,
                                          block_rows, **kw)
    else:
        last = pl.num_programs(0) - 1

        @pl.when(pl.program_id(0) != last)
        def _():
            out_ref[...] = _block_partial_sum(pred_ref, target_ref, weight_ref,
                                              block_rows, **kw)

        @pl.when(pl.program_id(0) == last)
        def _():
            out_ref[...] = _block_partial_sum(pred_ref, target_ref, weight_ref,
                                              last_rows, **kw)


def _kernel_unweighted(pred_ref, target_ref, out_ref, **kw):
    _kernel_impl(pred_ref, target_ref, None, out_ref, **kw)


def _kernel_weighted(pred_ref, target_ref, weight_ref, out_ref, **kw):
    _kernel_impl(pred_ref, target_ref, weight_ref, out_ref, **kw)


def _balanced_l1_elementwise(pred, target, alpha, gamma, beta):
    """Plain-JAX elementwise Balanced-L1 (used for the tiny unaligned tail)."""
    diff = jnp.abs(pred - target)
    b = math.e ** (gamma / alpha) - 1.0
    return jnp.where(
        diff < beta,
        alpha / b * (b * diff + 1.0) * jnp.log(b * diff / beta + 1.0) - alpha * diff,
        gamma * diff + gamma / b - alpha * beta)


def balanced_l1_loss_pallas(pred, target, weight=None, *, alpha=0.5, gamma=1.5,
                            beta=1.0, reduction='mean', avg_factor=None,
                            loss_weight=1.0, max_block_rows=MAX_BLOCK_ROWS):
    """JAX/Pallas equivalent of BalancedL1Loss.forward (reduction in {'mean','sum'})."""
    assert beta > 0
    assert pred.shape == target.shape and pred.size > 0
    if reduction == 'none':
        # TODO(synk): reduction='none' returns the elementwise map; this kernel
        # implements the module's reduced ('mean'/'sum') hot path only.
        raise NotImplementedError("reduction='none' not supported by this kernel")
    assert reduction in ('mean', 'sum')
    if weight is not None:
        assert weight.shape == pred.shape

    numel = pred.size
    itemsize = jnp.dtype(pred.dtype).itemsize
    row_align = {4: ROW_ALIGN, 2: 16, 1: 32}.get(itemsize, ROW_ALIGN)
    align_elems = row_align * LANES

    pred_f = pred.reshape(-1)
    target_f = target.reshape(-1)
    weight_f = weight.reshape(-1) if weight is not None else None

    aligned = (numel // align_elems) * align_elems
    rows = aligned // LANES                         # multiple of row_align

    loss_sum = jnp.zeros((), jnp.float32)

    if rows > 0:
        # aligned == numel -> pure bitcast reshape (zero copies); otherwise a
        # prefix slice + reshape (no block-padded jnp.pad copy is ever made).
        pred2 = pred_f[:aligned].reshape(rows, LANES)
        target2 = target_f[:aligned].reshape(rows, LANES)
        operands = [pred2, target2]
        if weight_f is not None:
            operands.append(weight_f[:aligned].reshape(rows, LANES))

        # Block size: as big as VMEM comfortably allows, but force >= 2 grid
        # steps when possible so the "parallel" axis feeds both v7x TCs.
        mbr = max(row_align, _round_up(int(max_block_rows), row_align))
        block_rows = min(rows, mbr, _round_up(pl.cdiv(rows, 2), row_align))
        grid = pl.cdiv(rows, block_rows)
        last_rows = rows - (grid - 1) * block_rows   # multiple of row_align
        sub_rows = min(SUB_ROWS, block_rows)

        kern = functools.partial(
            _kernel_weighted if weight_f is not None else _kernel_unweighted,
            alpha=float(alpha), gamma=float(gamma), beta=float(beta),
            block_rows=block_rows, last_rows=last_rows, sub_rows=sub_rows)

        block_spec = pl.BlockSpec((block_rows, LANES), lambda i: (i, 0))
        out_rows = grid * ROW_ALIGN

        in_bytes = sum(int(x.size) * jnp.dtype(x.dtype).itemsize for x in operands)
        vmem_need = (sum(2 * block_rows * LANES * jnp.dtype(x.dtype).itemsize
                         for x in operands)
                     + 2 * ROW_ALIGN * LANES * 4)
        vmem_limit = int(max(vmem_need + (4 << 20), 16 << 20))   # + compiler slack

        partials = pl.pallas_call(
            kern,
            out_shape=jax.ShapeDtypeStruct((out_rows, LANES), jnp.float32),
            grid_spec=pltpu.PrefetchScalarGridSpec(
                num_scalar_prefetch=0,
                grid=(grid,),
                in_specs=[block_spec] * len(operands),
                out_specs=pl.BlockSpec((ROW_ALIGN, LANES), lambda i: (i, 0)),
            ),
            compiler_params=pltpu.CompilerParams(
                dimension_semantics=("parallel",),
                vmem_limit_bytes=vmem_limit),
            cost_estimate=pl.CostEstimate(
                flops=14 * aligned,
                transcendentals=aligned,
                bytes_accessed=in_bytes + out_rows * LANES * 4),
        )(*operands)
        loss_sum = jnp.sum(partials)

    if aligned < numel:
        # <= row_align*128 - 1 trailing elements: negligible, plain JAX.
        p_t = pred_f[aligned:].astype(jnp.float32)
        t_t = target_f[aligned:].astype(jnp.float32)
        tail = _balanced_l1_elementwise(p_t, t_t, alpha, gamma, beta)
        if weight_f is not None:
            tail = tail * weight_f[aligned:].astype(jnp.float32)
        loss_sum = loss_sum + jnp.sum(tail)

    if avg_factor is not None:
        if reduction != 'mean':
            raise ValueError('avg_factor can not be used with reduction="sum"')
        loss = loss_sum / avg_factor
    elif reduction == 'mean':
        loss = loss_sum / numel
    else:  # 'sum'
        loss = loss_sum

    return loss_weight * loss


def _reference(pred, target, weight, alpha, gamma, beta, reduction, avg_factor,
               loss_weight):
    loss = _balanced_l1_elementwise(pred.astype(jnp.float32),
                                    target.astype(jnp.float32),
                                    alpha, gamma, beta)
    if weight is not None:
        loss = loss * weight.astype(jnp.float32)
    if avg_factor is not None:
        loss = loss.sum() / avg_factor
    elif reduction == 'mean':
        loss = loss.mean()
    else:
        loss = loss.sum()
    return loss_weight * loss


if __name__ == "__main__":
    key = jax.random.PRNGKey(0)
    k1, k2, k3 = jax.random.split(key, 3)

    # bbox-regression style inputs: [num_boxes, 4]
    num_boxes = 512
    pred = jax.random.normal(k1, (num_boxes, 4), jnp.float32) * 2.0
    target = jax.random.normal(k2, (num_boxes, 4), jnp.float32) * 2.0
    weight = (jax.random.uniform(k3, (num_boxes, 4)) > 0.3).astype(jnp.float32)

    # default module config: alpha=0.5, gamma=1.5, beta=1.0, reduction='mean'
    out = jax.block_until_ready(
        balanced_l1_loss_pallas(pred, target, weight, reduction='mean'))
    ref = _reference(pred, target, weight, 0.5, 1.5, 1.0, 'mean', None, 1.0)
    assert jnp.allclose(out, ref, rtol=1e-5, atol=1e-5), (out, ref)

    # unweighted 'sum' path (no synthetic all-ones tensor streamed)
    out_sum = jax.block_until_ready(
        balanced_l1_loss_pallas(pred, target, None, reduction='sum'))
    ref_sum = _reference(pred, target, None, 0.5, 1.5, 1.0, 'sum', None, 1.0)
    assert jnp.allclose(out_sum, ref_sum, rtol=1e-5, atol=1e-3), (out_sum, ref_sum)

    # avg_factor + loss_weight path
    out_af = jax.block_until_ready(
        balanced_l1_loss_pallas(pred, target, weight, reduction='mean',
                                avg_factor=100.0, loss_weight=2.0))
    ref_af = _reference(pred, target, weight, 0.5, 1.5, 1.0, 'mean', 100.0, 2.0)
    assert jnp.allclose(out_af, ref_af, rtol=1e-5, atol=1e-4), (out_af, ref_af)

    # bf16 inputs stream as bf16 (2 B/elem) and upcast to f32 per chunk in-kernel
    pred_bf = pred.astype(jnp.bfloat16)
    target_bf = target.astype(jnp.bfloat16)
    out_bf = jax.block_until_ready(
        balanced_l1_loss_pallas(pred_bf, target_bf, None, reduction='mean'))
    ref_bf = _reference(pred_bf, target_bf, None, 0.5, 1.5, 1.0, 'mean', None, 1.0)
    assert jnp.allclose(out_bf, ref_bf, rtol=1e-5, atol=1e-5), (out_bf, ref_bf)

    # non-aligned size: exercises the plain-JAX tail AND a shorter last grid
    # block (rows=24, block_rows=16 -> grid=2, last block 8 valid rows).
    k4, k5 = jax.random.split(k1)
    pred_t = jax.random.normal(k4, (800, 4), jnp.float32)
    target_t = jax.random.normal(k5, (800, 4), jnp.float32)
    out_t = jax.block_until_ready(
        balanced_l1_loss_pallas(pred_t, target_t, None, reduction='mean',
                                max_block_rows=16))
    ref_t = _reference(pred_t, target_t, None, 0.5, 1.5, 1.0, 'mean', None, 1.0)
    assert jnp.allclose(out_t, ref_t, rtol=1e-5, atol=1e-5), (out_t, ref_t)

    # small non-aligned case (700x3 = 2100 elems -> 2048 through kernel + 52 tail)
    pred_s = jax.random.normal(k4, (700, 3), jnp.float32)
    target_s = jax.random.normal(k5, (700, 3), jnp.float32)
    out_s = jax.block_until_ready(
        balanced_l1_loss_pallas(pred_s, target_s, None, reduction='mean'))
    ref_s = _reference(pred_s, target_s, None, 0.5, 1.5, 1.0, 'mean', None, 1.0)
    assert jnp.allclose(out_s, ref_s, rtol=1e-5, atol=1e-5), (out_s, ref_s)

    print("KERNEL_OK")
</pallas_src>

<mosaic_0001>
module attributes {stable_mosaic.version = 11 : i64} {
  func.func @_kernel_weighted(%arg0: i32, %arg1: memref<8x128xf32, #tpu.memory_space<vmem>>, %arg2: memref<8x128xf32, #tpu.memory_space<vmem>>, %arg3: memref<8x128xf32, #tpu.memory_space<vmem>>, %arg4: memref<8x128xf32, #tpu.memory_space<vmem>>) attributes {dimension_semantics = [#tpu.dimension_semantics<parallel>], iteration_bounds = array<i64: 2>, scalar_prefetch = 0 : i64, scratch_operands = 0 : i64, tpu.core_type = #tpu.core_type<tc>, window_params = [{transform_indices = @transform_0, window_bounds = array<i64: 8, 128>}, {transform_indices = @transform_1, window_bounds = array<i64: 8, 128>}, {transform_indices = @transform_2, window_bounds = array<i64: 8, 128>}, {transform_indices = @transform_3, window_bounds = array<i64: 8, 128>}]} {
    %c0 = arith.constant 0 : index
    %c0_0 = arith.constant 0 : index
    %0 = vector.load %arg1[%c0, %c0_0] : memref<8x128xf32, #tpu.memory_space<vmem>>, vector<8x128xf32>
    %c0_1 = arith.constant 0 : index
    %c0_2 = arith.constant 0 : index
    %1 = vector.load %arg2[%c0_1, %c0_2] : memref<8x128xf32, #tpu.memory_space<vmem>>, vector<8x128xf32>
    %2 = arith.subf %0, %1 : vector<8x128xf32>
    %3 = math.absf %2 : vector<8x128xf32>
    %cst = arith.constant 5.000000e-01 : f32
    %4 = vector.broadcast %cst : f32 to vector<8x128xf32>
    %5 = arith.mulf %4, %3 : vector<8x128xf32>
    %cst_3 = arith.constant 0.0261978488 : f32
    %6 = vector.broadcast %cst_3 : f32 to vector<8x128xf32>
    %7 = arith.addf %5, %6 : vector<8x128xf32>
    %cst_4 = arith.constant 19.085537 : f32
    %8 = vector.broadcast %cst_4 : f32 to vector<8x128xf32>
    %9 = arith.mulf %3, %8 : vector<8x128xf32>
    %cst_5 = arith.constant 1.000000e+00 : f32
    %10 = vector.broadcast %cst_5 : f32 to vector<8x128xf32>
    %11 = arith.addf %9, %10 : vector<8x128xf32>
    %12 = math.log %11 : vector<8x128xf32>
    %13 = arith.mulf %7, %12 : vector<8x128xf32>
    %14 = arith.subf %13, %5 : vector<8x128xf32>
    %cst_6 = arith.constant 1.500000e+00 : f32
    %15 = vector.broadcast %cst_6 : f32 to vector<8x128xf32>
    %16 = arith.mulf %15, %3 : vector<8x128xf32>
    %cst_7 = arith.constant -0.421406448 : f32
    %17 = vector.broadcast %cst_7 : f32 to vector<8x128xf32>
    %18 = arith.addf %16, %17 : vector<8x128xf32>
    %cst_8 = arith.constant 1.000000e+00 : f32
    %19 = vector.broadcast %cst_8 : f32 to vector<8x128xf32>
    %20 = arith.cmpf olt, %3, %19 : vector<8x128xf32>
    %21 = arith.select %20, %14, %18 : vector<8x128xi1>, vector<8x128xf32>
    %c0_9 = arith.constant 0 : index
    %c0_10 = arith.constant 0 : index
    %22 = vector.load %arg3[%c0_9, %c0_10] : memref<8x128xf32, #tpu.memory_space<vmem>>, vector<8x128xf32>
    %23 = arith.mulf %21, %22 : vector<8x128xf32>
    %c0_11 = arith.constant 0 : index
    %c0_12 = arith.constant 0 : index
    %24 = vector.load %arg4[%c0_11, %c0_12] : memref<8x128xf32, #tpu.memory_space<vmem>>, vector<8x128xf32>
    tpu.vector_store %arg4[%c0_11, %c0_12], %23 {strides = array<i32>} : memref<8x128xf32, #tpu.memory_space<vmem>>, vector<8x128xf32>,
    return
  }
  func.func @transform_0(%arg0: i32) -> (i32, i32) {
    %c0_i32 = arith.constant 0 : i32
    %c0_i32_0 = arith.constant 0 : i32
    return %arg0, %c0_i32 : i32, i32
  }
  func.func @transform_1(%arg0: i32) -> (i32, i32) {
    %c0_i32 = arith.constant 0 : i32
    %c0_i32_0 = arith.constant 0 : i32
    return %arg0, %c0_i32 : i32, i32
  }
  func.func @transform_2(%arg0: i32) -> (i32, i32) {
    %c0_i32 = arith.constant 0 : i32
    %c0_i32_0 = arith.constant 0 : i32
    return %arg0, %c0_i32 : i32, i32
  }
  func.func @transform_3(%arg0: i32) -> (i32, i32) {
    %c0_i32 = arith.constant 0 : i32
    %c0_i32_0 = arith.constant 0 : i32
    return %arg0, %c0_i32 : i32, i32
  }
}

</mosaic_0001>

<llo_original>
// kernel: tpu_custom_call.1
$region0: #{tpu_custom_call.1}
  #allocation0 [shape = 'u32[]', space=smem, size = 0x4, offset = 0x4, fixed_abs, tag = 'smem constant byte address 0x4 - core index']
  #allocation1 [shape = 'u32[144,128]{1,0:T(1,128)}', space=vmem, size = 0x12000, scoped, tag = 'internal scratch']
  %s0 = inlined_call_operand.hbm [shape: f32[16,128], index: 0, kind: input, shape index: {}]
  %s1 = inlined_call_operand.hbm [shape: f32[16,128], index: 1, kind: input, shape index: {}]
  %s2 = inlined_call_operand.hbm [shape: f32[16,128], index: 2, kind: input, shape index: {}]
  %s3 = inlined_call_operand.hbm [shape: f32[16,128], index: 3, kind: output, shape index: {}]
  %s4 = sld [smem:[#allocation0]]
  $region57: #{tpu_custom_call.1} parent=0
    _
  %s6 = ssub.s32 1, %s4
  %s7 = scalar_select 0, %s6, %s4
  $region1: #{tpu_custom_call.1} parent=0
    #allocation2 [shape = 'u8[8192]{0}', space=vmem, size = 0x2000, scoped, tag = 'input window, operand 0']
    #allocation3 [shape = 's32[2]{0}', space=sflag, size = 0x8, scoped, tag = 'scoped memory for tpu_custom_call.1']
    #allocation4 [shape = 's32[2]{0}', space=sflag, size = 0x8, scoped, tag = 'scoped memory for tpu_custom_call.1']
    #allocation5 [shape = 'u8[8192]{0}', space=vmem, size = 0x2000, scoped, tag = 'input window, operand 1']
    #allocation6 [shape = 's32[2]{0}', space=sflag, size = 0x8, scoped, tag = 'scoped memory for tpu_custom_call.1']
    #allocation7 [shape = 'u8[8192]{0}', space=vmem, size = 0x2000, scoped, tag = 'input window, operand 2']
    #allocation8 [shape = 'u8[8192]{0}', space=vmem, size = 0x2000, scoped, tag = 'output window, operand 0']
    %8 = vsyncpa [#allocation3], 0
    %s9 = scalar_lea.sflag [#allocation3], 1
    %10 = vsyncpa %s9, 0
    %11 = vsyncpa [#allocation6], 0
    %s12 = scalar_lea.sflag [#allocation6], 1
    %13 = vsyncpa %s12, 0
    %14 = vsyncpa [#allocation4], 0
    %s15 = scalar_lea.sflag [#allocation4], 1
    %16 = vsyncpa %s15, 0
    loop: start=0, step=1, limit=4
    $region2: #{tpu_custom_call.1} parent=1 // loop_pre_header
      _
    $region3: #{tpu_custom_call.1} parent=1 // loop_header
      %s18 = sphi 0, %s22
      %p19 = scmp.ge.s32.totalorder %s18, 4
      %s28 = sphi 0, %s30
      %s31 = sphi 0, %s28
      %s32 = sphi 0, %s31
      %s48 = sphi 0, %s32
      %s54 = sphi 0, %s56
      %s57 = sphi 0, %s54
      %s58 = sphi 0, %s57
      %s74 = sphi 0, %s58
      %s80 = sphi 0, %s82
      %s83 = sphi 0, %s80
      %s84 = sphi 0, %s83
      %s100 = sphi 0, %s84
      %s106 = sphi 0, %s108
      %s109 = sphi 0, %s106
      %s110 = sphi 0, %s109
      %s126 = sphi 0, %s110
    $region4: #{tpu_custom_call.1} parent=1 // loop_header_branch
      %21 = sbr.rel (%p19) target = $region8
    $region5: #{tpu_custom_call.1} parent=1 // loop_body
      %s23 = ssub.s32 %s18, 1
      %s24 = ssub.s32 %s18, 2
      %s25 = sadd.s32 %s18, 1
      %s26 = ssub.s32 %s18, %s25
      %p27 = scmp.eq.s32.totalorder %s26, 0
      %s29 = sadd.s32 %s28, 1
      %s30 = scalar_select %p27, %s28, %s29
      %p33 = pneg %p27
      %p34 = scmp.eq.s32.totalorder %s18, 1
      %p35 = por %p33, %p34
      %p36 = scmp.ne.s32.totalorder %s28, %s31
      %p37 = scmp.eq.s32.totalorder %s18, 0
      %p38 = por %p36, %p37
      %p39 = scmp.ne.s32.totalorder %s28, %s31
      %p40 = scmp.eq.s32.totalorder %s23, 1
      %p41 = por %p39, %p40
      %p42 = scmp.ne.s32.totalorder %s31, %s32
      %p43 = scmp.eq.s32.totalorder %s23, 0
      %p44 = por %p42, %p43
      %p45 = scmp.ne.s32.totalorder %s31, %s32
      %p46 = scmp.eq.s32.totalorder %s24, 1
      %p47 = por %p45, %p46
      %p49 = scmp.ne.s32.totalorder %s32, %s48
      %p50 = scmp.eq.s32.totalorder %s24, 0
      %p51 = por %p49, %p50
      %s52 = ssub.s32 %s18, %s25
      %p53 = scmp.eq.s32.totalorder %s52, 0
      %s55 = sadd.s32 %s54, 1
      %s56 = scalar_select %p53, %s54, %s55
      %p59 = pneg %p53
      %p60 = scmp.eq.s32.totalorder %s18, 1
      %p61 = por %p59, %p60
      %p62 = scmp.ne.s32.totalorder %s54, %s57
      %p63 = scmp.eq.s32.totalorder %s18, 0
      %p64 = por %p62, %p63
      %p65 = scmp.ne.s32.totalorder %s54, %s57
      %p66 = scmp.eq.s32.totalorder %s23, 1
      %p67 = por %p65, %p66
      %p68 = scmp.ne.s32.totalorder %s57, %s58
      %p69 = scmp.eq.s32.totalorder %s23, 0
      %p70 = por %p68, %p69
      %p71 = scmp.ne.s32.totalorder %s57, %s58
      %p72 = scmp.eq.s32.totalorder %s24, 1
      %p73 = por %p71, %p72
      %p75 = scmp.ne.s32.totalorder %s58, %s74
      %p76 = scmp.eq.s32.totalorder %s24, 0
      %p77 = por %p75, %p76
      %s78 = ssub.s32 %s18, %s25
      %p79 = scmp.eq.s32.totalorder %s78, 0
      %s81 = sadd.s32 %s80, 1
      %s82 = scalar_select %p79, %s80, %s81
      %p85 = pneg %p79
      %p86 = scmp.eq.s32.totalorder %s18, 1
      %p87 = por %p85, %p86
      %p88 = scmp.ne.s32.totalorder %s80, %s83
      %p89 = scmp.eq.s32.totalorder %s18, 0
      %p90 = por %p88, %p89
      %p91 = scmp.ne.s32.totalorder %s80, %s83
      %p92 = scmp.eq.s32.totalorder %s23, 1
      %p93 = por %p91, %p92
      %p94 = scmp.ne.s32.totalorder %s83, %s84
      %p95 = scmp.eq.s32.totalorder %s23, 0
      %p96 = por %p94, %p95
      %p97 = scmp.ne.s32.totalorder %s83, %s84
      %p98 = scmp.eq.s32.totalorder %s24, 1
      %p99 = por %p97, %p98
      %p101 = scmp.ne.s32.totalorder %s84, %s100
      %p102 = scmp.eq.s32.totalorder %s24, 0
      %p103 = por %p101, %p102
      %s104 = ssub.s32 %s18, %s25
      %p105 = scmp.eq.s32.totalorder %s104, 0
      %s107 = sadd.s32 %s106, 1
      %s108 = scalar_select %p105, %s106, %s107
      %p111 = pneg %p105
      %p112 = scmp.eq.s32.totalorder %s18, 1
      %p113 = por %p111, %p112
      %p114 = scmp.ne.s32.totalorder %s106, %s109
      %p115 = scmp.eq.s32.totalorder %s18, 0
      %p116 = por %p114, %p115
      %p117 = scmp.ne.s32.totalorder %s106, %s109
      %p118 = scmp.eq.s32.totalorder %s23, 1
      %p119 = por %p117, %p118
      %p120 = scmp.ne.s32.totalorder %s109, %s110
      %p121 = scmp.eq.s32.totalorder %s23, 0
      %p122 = por %p120, %p121
      %p123 = scmp.ne.s32.totalorder %s109, %s110
      %p124 = scmp.eq.s32.totalorder %s24, 1
      %p125 = por %p123, %p124
      %p127 = scmp.ne.s32.totalorder %s110, %s126
      %p128 = scmp.eq.s32.totalorder %s24, 0
      %p129 = por %p127, %p128
      %p130 = scmp.le.s32.totalorder 1, %s18
      %p131 = scmp.lt.s32.totalorder %s18, 3
      %p132 = pnand %p130, %p131
      %p133 = pneg %p132
      // Predicated region
      $region9: #{tpu_custom_call.1} parent=5 // pred_check
        _
      $region10: #{tpu_custom_call.1} parent=5 // pred_check_branch
        %135 = sbr.rel (%p132) target = $region12
      $region11: #{tpu_custom_call.1} parent=5 // pred_region
        %s136 = ssub.s32 %s18, 1
      $region12: #{tpu_custom_call.1} parent=5 // pred_fallthru
        _
      %p137 = scmp.lt.s32.totalorder %s18, 2
      // Predicated region
      $region13: #{tpu_custom_call.1} parent=5 // pred_check
        %p138 = pneg %p137
      $region14: #{tpu_custom_call.1} parent=5 // pred_check_branch
        %140 = sbr.rel (%p138) target = $region16
      $region15: #{tpu_custom_call.1} parent=5 // pred_region
        // Predicated region
        $region17: #{tpu_custom_call.1} parent=15 // pred_check
          %p141 = pneg %p38
        $region18: #{tpu_custom_call.1} parent=15 // pred_check_branch
          %143 = sbr.rel (%p141) target = $region20
        $region19: #{tpu_custom_call.1} parent=15 // pred_region
          %s144 = sand.u32 %s28, 1
          %s145 = scalar_lea.sflag [#allocation3], %s144
          %s146 = sand.u32 %s28, 1
          %s147 = smul.addr %s146, 8
          %s148 = scalar_lea.vmem [#allocation2], %s147
          %s150 = ssub.s32 128, 128
          %151 = vsyncadd %s145, %s150
          %s152 = smul.addr %s18, 128
          %s153 = scalar_lea.hbm %s0, %s152
          %s155 = sshll.u32 %s148, 4
          %s156 = int_to_ptr.vmem [resolvable:$true] %s155
          %158 = dma.hbm_to_vmem [thread:$0]  %s153, 128, %s156, %s145
        $region20: #{tpu_custom_call.1} parent=15 // pred_fallthru
          _
        // Predicated region
        $region21: #{tpu_custom_call.1} parent=15 // pred_check
          %p159 = pneg %p64
        $region22: #{tpu_custom_call.1} parent=15 // pred_check_branch
          %161 = sbr.rel (%p159) target = $region24
        $region23: #{tpu_custom_call.1} parent=15 // pred_region
          %s162 = sand.u32 %s18, 1
          %s163 = scalar_lea.sflag [#allocation6], %s162
          %s164 = sand.u32 %s54, 1
          %s165 = smul.addr %s164, 8
          %s166 = scalar_lea.vmem [#allocation5], %s165
          %s168 = ssub.s32 128, 128
          %169 = vsyncadd %s163, %s168
          %s170 = smul.addr %s18, 128
          %s171 = scalar_lea.hbm %s1, %s170
          %s173 = sshll.u32 %s166, 4
          %s174 = int_to_ptr.vmem [resolvable:$true] %s173
          %176 = dma.hbm_to_vmem [thread:$0]  %s171, 128, %s174, %s163
        $region24: #{tpu_custom_call.1} parent=15 // pred_fallthru
          _
        // Predicated region
        $region25: #{tpu_custom_call.1} parent=15 // pred_check
          %p177 = pneg %p90
        $region26: #{tpu_custom_call.1} parent=15 // pred_check_branch
          %179 = sbr.rel (%p177) target = $region28
        $region27: #{tpu_custom_call.1} parent=15 // pred_region
          %s180 = sand.u32 %s18, 1
          %s181 = scalar_lea.sflag [#allocation6], %s180
          %s182 = sand.u32 %s80, 1
          %s183 = smul.addr %s182, 8
          %s184 = scalar_lea.vmem [#allocation7], %s183
          %s186 = ssub.s32 128, 128
          %187 = vsyncadd %s181, %s186
          %s188 = smul.addr %s18, 128
          %s189 = scalar_lea.hbm %s2, %s188
          %s191 = sshll.u32 %s184, 4
          %s192 = int_to_ptr.vmem [resolvable:$true] %s191
          %194 = dma.hbm_to_vmem [thread:$0]  %s189, 128, %s192, %s181
        $region28: #{tpu_custom_call.1} parent=15 // pred_fallthru
          _
      $region16: #{tpu_custom_call.1} parent=5 // pred_fallthru
        _
      %p195 = scmp.le.s32.totalorder 1, %s18
      %p196 = scmp.lt.s32.totalorder %s18, 3
      %p197 = pnand %p195, %p196
      %p198 = pneg %p197
      // Predicated region
      $region29: #{tpu_custom_call.1} parent=5 // pred_check
        _
      $region30: #{tpu_custom_call.1} parent=5 // pred_check_branch
        %200 = sbr.rel (%p197) target = $region32
      $region31: #{tpu_custom_call.1} parent=5 // pred_region
        %s201 = ssub.s32 %s18, 1
        %s202 = sand.u32 %s31, 1
        %s203 = scalar_lea.sflag [#allocation3], %s202
        %s204 = sand.u32 %s31, 1
        %s205 = smul.addr %s204, 8
        %s206 = scalar_lea.vmem [#allocation2], %s205
        // Predicated region
        $region33: #{tpu_custom_call.1} parent=31 // pred_check
          %p207 = pneg %p44
        $region34: #{tpu_custom_call.1} parent=31 // pred_check_branch
          %209 = sbr.rel (%p207) target = $region36
        $region35: #{tpu_custom_call.1} parent=31 // pred_region
          %210 = dma.done %s203, 128
        $region36: #{tpu_custom_call.1} parent=31 // pred_fallthru
          _
        %s211 = sand.u32 %s23, 1
        %s212 = scalar_lea.sflag [#allocation6], %s211
        %s213 = sand.u32 %s57, 1
        %s214 = smul.addr %s213, 8
        %s215 = scalar_lea.vmem [#allocation5], %s214
        // Predicated region
        $region37: #{tpu_custom_call.1} parent=31 // pred_check
          %p216 = pneg %p70
        $region38: #{tpu_custom_call.1} parent=31 // pred_check_branch
          %218 = sbr.rel (%p216) target = $region40
        $region39: #{tpu_custom_call.1} parent=31 // pred_region
          %219 = dma.done %s212, 128
        $region40: #{tpu_custom_call.1} parent=31 // pred_fallthru
          _
        %s220 = sand.u32 %s23, 1
        %s221 = scalar_lea.sflag [#allocation6], %s220
        %s222 = sand.u32 %s83, 1
        %s223 = smul.addr %s222, 8
        %s224 = scalar_lea.vmem [#allocation7], %s223
        // Predicated region
        $region41: #{tpu_custom_call.1} parent=31 // pred_check
          %p225 = pneg %p96
        $region42: #{tpu_custom_call.1} parent=31 // pred_check_branch
          %227 = sbr.rel (%p225) target = $region44
        $region43: #{tpu_custom_call.1} parent=31 // pred_region
          %228 = dma.done %s221, 128
        $region44: #{tpu_custom_call.1} parent=31 // pred_fallthru
          _
        %s229 = sand.u32 %s31, 1
        %s230 = scalar_lea.sflag [#allocation3], %s229
        %s231 = sand.u32 %s31, 1
        %s232 = smul.addr %s231, 8
        %s233 = scalar_lea.vmem [#allocation2], %s232
        %p234 = pneg %p44
        %p235 = pneg %p41
        %s236 = sand.u32 %s23, 1
        %s237 = scalar_lea.sflag [#allocation6], %s236
        %s238 = sand.u32 %s57, 1
        %s239 = smul.addr %s238, 8
        %s240 = scalar_lea.vmem [#allocation5], %s239
        %p241 = pneg %p70
        %p242 = pneg %p67
        %s243 = sand.u32 %s23, 1
        %s244 = scalar_lea.sflag [#allocation6], %s243
        %s245 = sand.u32 %s83, 1
        %s246 = smul.addr %s245, 8
        %s247 = scalar_lea.vmem [#allocation7], %s246
        %p248 = pneg %p96
        %p249 = pneg %p93
        %p250 = pneg %p122
        %p251 = pneg %p119
        %s252 = sand.u32 %s109, 1
        %s253 = scalar_lea.sflag [#allocation4], %s252
        %s254 = sand.u32 %s109, 1
        %s255 = smul.addr %s254, 8
        %s256 = scalar_lea.vmem [#allocation8], %s255
        %v257 = vld [vmem:[%s206] sm:$0xff]
        %v258 = vld [vmem:[%s215] sm:$0xff]
        %v259 = vsub.f32 %v257, %v258
        %v260 = vand.u32 2147483647, %v259
        %v261 = vmul.f32 %v260, 0.5
        %v262 = vadd.f32 %v261, 0.026197849
        %v263 = vmul.f32 %v260, 19.085537
        %v264 = vadd.f32 %v263, 1.0
        %v265 = vlog2.pop %v264
        %v266 = vmul.f32 %v265, 0.6931472
        %v267 = vmul.f32 %v262, %v266
        %v268 = vsub.f32 %v267, %v261
        %v269 = vmul.f32 %v260, 1.5
        %v270 = vadd.f32 %v269, -0.42140645
        %vm271 = vcmp.lt.f32.partialorder %v260, 1.0
        %v272 = vsel %vm271, %v268, %v270
        %v273 = vld [vmem:[%s224] sm:$0xff]
        %v274 = vmul.f32 %v272, %v273
        %275 = vst [vmem:[%s256] sm:$0xff] %v274
        %s276 = sand.u32 %s109, 1
        %s277 = scalar_lea.sflag [#allocation4], %s276
        %s278 = sand.u32 %s109, 1
        %s279 = smul.addr %s278, 8
        %s280 = scalar_lea.vmem [#allocation8], %s279
        // Predicated region
        $region45: #{tpu_custom_call.1} parent=31 // pred_check
          %p281 = pneg %p119
        $region46: #{tpu_custom_call.1} parent=31 // pred_check_branch
          %283 = sbr.rel (%p281) target = $region48
        $region47: #{tpu_custom_call.1} parent=31 // pred_region
          %s285 = ssub.s32 128, 128
          %286 = vsyncadd %s277, %s285
          %s287 = smul.addr %s23, 128
          %s288 = scalar_lea.hbm %s3, %s287
          %s290 = sshll.u32 %s280, 4
          %s291 = int_to_ptr.vmem [resolvable:$true] %s290
          %293 = dma.vmem_to_hbm [thread:$0]  %s291, 128, %s288, %s277
        $region48: #{tpu_custom_call.1} parent=31 // pred_fallthru
          _
      $region32: #{tpu_custom_call.1} parent=5 // pred_fallthru
        _
      %p294 = scmp.le.s32.totalorder 2, %s18
      // Predicated region
      $region49: #{tpu_custom_call.1} parent=5 // pred_check
        %p295 = pneg %p294
      $region50: #{tpu_custom_call.1} parent=5 // pred_check_branch
        %297 = sbr.rel (%p295) target = $region52
      $region51: #{tpu_custom_call.1} parent=5 // pred_region
        %s298 = ssub.s32 %s18, 2
        // Predicated region
        $region53: #{tpu_custom_call.1} parent=51 // pred_check
          %p299 = pneg %p125
        $region54: #{tpu_custom_call.1} parent=51 // pred_check_branch
          %301 = sbr.rel (%p299) target = $region56
        $region55: #{tpu_custom_call.1} parent=51 // pred_region
          %s302 = sand.u32 %s110, 1
          %s303 = scalar_lea.sflag [#allocation4], %s302
          %s304 = sand.u32 %s110, 1
          %s305 = smul.addr %s304, 8
          %s306 = scalar_lea.vmem [#allocation8], %s305
          %307 = dma.done %s303, 128
        $region56: #{tpu_custom_call.1} parent=51 // pred_fallthru
          _
      $region52: #{tpu_custom_call.1} parent=5 // pred_fallthru
        _
    $region6: #{tpu_custom_call.1} parent=1 // loop_footer
      %s22 = sadd.s32 1, %s18
    $region7: #{tpu_custom_call.1} parent=1 // loop_footer_branch
      %17 = sbr.rel target = $region3
    $region8: #{tpu_custom_call.1} parent=1 // loop_exit
      _
    %308 = vsyncpa [#allocation3], 1
    %s309 = scalar_lea.sflag [#allocation3], 1
    %310 = vsyncpa %s309, 1
    %311 = vsyncpa [#allocation6], 1
    %s312 = scalar_lea.sflag [#allocation6], 1
    %313 = vsyncpa %s312, 1
    %314 = vsyncpa [#allocation4], 1
    %s315 = scalar_lea.sflag [#allocation4], 1
    %316 = vsyncpa %s315, 1

</llo_original>
